<compile_context>
chip_gen: v5e
topology: v5e:2x2
jax: 0.10.0
libtpu: 0.0.40
codegen_flags: <defaults>
</compile_context>

<pallas_src>
import jax
import jax.numpy as jnp
from jax.experimental import pallas as pl
from jax.experimental.pallas import tpu as pltpu


def _mm_fusion_kernel(text_ref, audio_ref, visual_ref,
                      w_all_ref, b_all_ref,
                      wo_ref, bo_ref,
                      out_ref):
    B, S, Dt = text_ref.shape
    Da = audio_ref.shape[-1]
    Dv = visual_ref.shape[-1]
    D_all = Dt + Da + Dv

    # ---- fused projection: concat modalities on the feature axis, flatten
    #      batch*seq into the matmul row dim -> one MXU matmul ----
    x = jnp.concatenate(
        [text_ref[...], audio_ref[...], visual_ref[...]], axis=-1)   # (B,S,D_all)
    x2d = x.reshape(B * S, D_all)                                    # layout no-op

    h = jnp.dot(x2d.astype(jnp.bfloat16), w_all_ref[...],            # bf16 MXU,
                preferred_element_type=jnp.float32)                  # f32 acc
    h = jnp.maximum(h + b_all_ref[...], 0.0)                         # 1 bias + 1 ReLU (f32)

    # ---- sum-pool over the sequence axis (1/S folded into wo wrapper-side) ----
    pooled = jnp.sum(h.reshape(B, S, 3 * (w_all_ref.shape[-1] // 3)), axis=1)  # (B, 3H)

    # ---- fused classifier head: one matmul + bias ----
    logits = jnp.dot(pooled.astype(jnp.bfloat16), wo_ref[...],
                     preferred_element_type=jnp.float32) + bo_ref[...]   # (B, C)

    out_ref[...] = logits.astype(out_ref.dtype)


def forward_only_wrapper(text, audio, visual, params):
    """Pallas implementation of ForwardOnlyWrapper.forward: returns logits."""
    B, S, Dt = text.shape
    Da = audio.shape[-1]
    Dv = visual.shape[-1]
    H = params["wt"].shape[-1]
    C = params["bo"].shape[-1]
    D_all = Dt + Da + Dv

    # ---- wrapper-side parameter fusion (one-time layout plumbing) ----
    # Block-diagonal projection weight (D_all, 3H): 3 matmuls -> 1.
    w_all = jnp.zeros((D_all, 3 * H), dtype=jnp.float32)
    w_all = w_all.at[:Dt, :H].set(params["wt"])
    w_all = w_all.at[Dt:Dt + Da, H:2 * H].set(params["wa"])
    w_all = w_all.at[Dt + Da:, 2 * H:].set(params["wv"])
    # Concatenated projection bias (1, 3H).
    b_all = jnp.concatenate([params["bt"], params["ba"], params["bv"]], axis=-1)
    # Fused head weight (3H, C) with the 1/S mean-pool scale folded in.
    wo = jnp.concatenate(
        [params["wot"], params["woa"], params["wov"]], axis=0) * (1.0 / S)

    args = (text, audio, visual,
            w_all.astype(jnp.bfloat16), b_all,
            wo.astype(jnp.bfloat16), params["bo"])

    vmem = pl.BlockSpec(memory_space=pltpu.MemorySpace.VMEM)

    # Shapes are small -> single grid point, everything resident in VMEM.
    return pl.pallas_call(
        _mm_fusion_kernel,
        out_shape=jax.ShapeDtypeStruct((B, C), jnp.float32),
        in_specs=[vmem] * len(args),
        out_specs=vmem,
    )(*args)


def _reference(text, audio, visual, params):
    """Pure-f32 reference of the original module semantics."""
    def proj(x, w, b):
        return jnp.maximum(jnp.einsum('bsd,dh->bsh', x, w) + b[None, :, :], 0.0)
    pt = jnp.mean(proj(text, params["wt"], params["bt"]), axis=1)
    pa = jnp.mean(proj(audio, params["wa"], params["ba"]), axis=1)
    pv = jnp.mean(proj(visual, params["wv"], params["bv"]), axis=1)
    fused = jnp.concatenate([pt, pa, pv], axis=-1)
    wo = jnp.concatenate([params["wot"], params["woa"], params["wov"]], axis=0)
    return fused @ wo + params["bo"]


if __name__ == "__main__":
    # Small shapes consistent with the (text, audio, visual) sequence forward.
    B, S = 2, 8
    Dt, Da, Dv = 32, 16, 16
    H, C = 32, 8

    key = jax.random.PRNGKey(0)
    keys = jax.random.split(key, 12)

    text = jax.random.normal(keys[0], (B, S, Dt), dtype=jnp.float32)
    audio = jax.random.normal(keys[1], (B, S, Da), dtype=jnp.float32)
    visual = jax.random.normal(keys[2], (B, S, Dv), dtype=jnp.float32)

    def init_w(k, fan_in, fan_out):
        return jax.random.normal(k, (fan_in, fan_out), dtype=jnp.float32) / jnp.sqrt(fan_in)

    params = {
        "wt": init_w(keys[3], Dt, H),
        "bt": jax.random.normal(keys[4], (1, H), dtype=jnp.float32) * 0.01,
        "wa": init_w(keys[5], Da, H),
        "ba": jax.random.normal(keys[6], (1, H), dtype=jnp.float32) * 0.01,
        "wv": init_w(keys[7], Dv, H),
        "bv": jax.random.normal(keys[8], (1, H), dtype=jnp.float32) * 0.01,
        # output head weight (3H, C) stored pre-split per modality
        "wot": init_w(keys[9], H, C),
        "woa": init_w(keys[10], H, C),
        "wov": init_w(keys[11], H, C),
        "bo": jnp.zeros((1, C), dtype=jnp.float32),
    }

    logits = forward_only_wrapper(text, audio, visual, params)
    jax.block_until_ready(logits)

    ref = _reference(text, audio, visual, params)
    assert logits.shape == (B, C)
    # Tolerance loosened for bf16 MXU operands (f32 accumulation).
    assert jnp.allclose(logits, ref, atol=5e-2, rtol=5e-2), "mismatch vs reference"

    print("KERNEL_OK")
</pallas_src>

<mosaic_0001>
module attributes {stable_mosaic.version = 11 : i64} {
  func.func @_mm_fusion_kernel(%arg0: memref<2x8x32xf32, #tpu.memory_space<vmem>>, %arg1: memref<2x8x16xf32, #tpu.memory_space<vmem>>, %arg2: memref<2x8x16xf32, #tpu.memory_space<vmem>>, %arg3: memref<64x96xbf16, #tpu.memory_space<vmem>>, %arg4: memref<1x96xf32, #tpu.memory_space<vmem>>, %arg5: memref<96x8xbf16, #tpu.memory_space<vmem>>, %arg6: memref<1x8xf32, #tpu.memory_space<vmem>>, %arg7: memref<2x8xf32, #tpu.memory_space<vmem>>) attributes {dimension_semantics = [], scalar_prefetch = 0 : i64, scratch_operands = 0 : i64, tpu.core_type = #tpu.core_type<tc>} {
    %c0 = arith.constant 0 : index
    %c0_0 = arith.constant 0 : index
    %c0_1 = arith.constant 0 : index
    %0 = vector.load %arg0[%c0, %c0_0, %c0_1] : memref<2x8x32xf32, #tpu.memory_space<vmem>>, vector<2x8x32xf32>
    %c0_2 = arith.constant 0 : index
    %c0_3 = arith.constant 0 : index
    %c0_4 = arith.constant 0 : index
    %1 = vector.load %arg1[%c0_2, %c0_3, %c0_4] : memref<2x8x16xf32, #tpu.memory_space<vmem>>, vector<2x8x16xf32>
    %c0_5 = arith.constant 0 : index
    %c0_6 = arith.constant 0 : index
    %c0_7 = arith.constant 0 : index
    %2 = vector.load %arg2[%c0_5, %c0_6, %c0_7] : memref<2x8x16xf32, #tpu.memory_space<vmem>>, vector<2x8x16xf32>
    %3 = tpu.concatenate %0, %1, %2 in 2 : vector<2x8x32xf32>, vector<2x8x16xf32>, vector<2x8x16xf32> -> vector<2x8x64xf32>
    %4 = vector.shape_cast %3 : vector<2x8x64xf32> to vector<16x64xf32>
    %5 = arith.truncf %4 : vector<16x64xf32> to vector<16x64xbf16>
    %c0_8 = arith.constant 0 : index
    %c0_9 = arith.constant 0 : index
    %6 = vector.load %arg3[%c0_8, %c0_9] : memref<64x96xbf16, #tpu.memory_space<vmem>>, vector<64x96xbf16>
    %cst = arith.constant dense<0.000000e+00> : vector<16x96xf32>
    %7 = tpu.matmul %5, %6, %cst {dimension_numbers = #tpu.dot_dimension_numbers<[1], [0], [0], [1], [0, 0, 1, 1], [], []>} : vector<16x64xbf16>, vector<64x96xbf16>, vector<16x96xf32> -> vector<16x96xf32>
    %c0_10 = arith.constant 0 : index
    %c0_11 = arith.constant 0 : index
    %8 = vector.load %arg4[%c0_10, %c0_11] : memref<1x96xf32, #tpu.memory_space<vmem>>, vector<1x96xf32>
    %9 = vector.broadcast %8 : vector<1x96xf32> to vector<16x96xf32>
    %10 = arith.addf %7, %9 : vector<16x96xf32>
    %cst_12 = arith.constant 0.000000e+00 : f32
    %11 = vector.broadcast %cst_12 : f32 to vector<16x96xf32>
    %12 = arith.maximumf %10, %11 : vector<16x96xf32>
    %13 = vector.shape_cast %12 : vector<16x96xf32> to vector<2x8x96xf32>
    %cst_13 = arith.constant dense<0.000000e+00> : vector<2x96xf32>
    %14 = vector.multi_reduction <add>, %13, %cst_13 [1] : vector<2x8x96xf32> to vector<2x96xf32>
    %15 = arith.truncf %14 : vector<2x96xf32> to vector<2x96xbf16>
    %c0_14 = arith.constant 0 : index
    %c0_15 = arith.constant 0 : index
    %16 = vector.load %arg5[%c0_14, %c0_15] : memref<96x8xbf16, #tpu.memory_space<vmem>>, vector<96x8xbf16>
    %cst_16 = arith.constant dense<0.000000e+00> : vector<2x8xf32>
    %17 = tpu.matmul %15, %16, %cst_16 {dimension_numbers = #tpu.dot_dimension_numbers<[1], [0], [0], [1], [0, 0, 1, 1], [], []>} : vector<2x96xbf16>, vector<96x8xbf16>, vector<2x8xf32> -> vector<2x8xf32>
    %c0_17 = arith.constant 0 : index
    %c0_18 = arith.constant 0 : index
    %18 = vector.load %arg6[%c0_17, %c0_18] : memref<1x8xf32, #tpu.memory_space<vmem>>, vector<1x8xf32>
    %19 = vector.broadcast %18 : vector<1x8xf32> to vector<2x8xf32>
    %20 = arith.addf %17, %19 : vector<2x8xf32>
    %c0_19 = arith.constant 0 : index
    %c0_20 = arith.constant 0 : index
    %21 = vector.load %arg7[%c0_19, %c0_20] : memref<2x8xf32, #tpu.memory_space<vmem>>, vector<2x8xf32>
    tpu.vector_store %arg7[%c0_19, %c0_20], %20 {strides = array<i32>} : memref<2x8xf32, #tpu.memory_space<vmem>>, vector<2x8xf32>,
    return
  }
}

</mosaic_0001>

<llo_original>
// kernel: tpu_custom_call.1
$region0: #{tpu_custom_call.1}
  #allocation0 [shape = 'u32[]', space=smem, size = 0x4, offset = 0x4, fixed_abs, tag = 'smem constant byte address 0x4 - core index']
  #allocation1 [shape = 'u32[72,128]{1,0:T(1,128)}', space=vmem, size = 0x9000, scoped, tag = 'internal scratch']
  %s0 = inlined_call_operand.vmem [shape: f32[2,8,32], index: 0, kind: input, shape index: {}]
  %s1 = inlined_call_operand.hbm [shape: f32[2,8,16], index: 1, kind: input, shape index: {}]
  %s2 = inlined_call_operand.hbm [shape: f32[2,8,16], index: 2, kind: input, shape index: {}]
  %s3 = inlined_call_operand.vmem [shape: bf16[64,96], index: 3, kind: input, shape index: {}]
  %s4 = inlined_call_operand.vmem [shape: f32[1,96], index: 4, kind: input, shape index: {}]
  %s5 = inlined_call_operand.vmem [shape: bf16[96,8], index: 5, kind: input, shape index: {}]
  %s6 = inlined_call_operand.vmem [shape: f32[1,8], index: 6, kind: input, shape index: {}]
  %s7 = inlined_call_operand.hbm [shape: f32[2,8], index: 7, kind: output, shape index: {}]
  %s8 = sld [smem:[#allocation0]]
  $region46: #{tpu_custom_call.1} parent=0
    _
  %s10 = ssub.s32 1, %s8
  %s11 = scalar_select 0, %s10, %s8
  $region1: #{tpu_custom_call.1} parent=0
    #allocation2 [shape = 'u8[8192]{0}', space=vmem, size = 0x2000, scoped, tag = 'input window, operand 1, single buffered']
    #allocation3 [shape = 's32[1]{0}', space=sflag, size = 0x4, scoped, tag = 'scoped memory for tpu_custom_call.1']
    #allocation4 [shape = 's32[1]{0}', space=sflag, size = 0x4, scoped, tag = 'scoped memory for tpu_custom_call.1']
    #allocation5 [shape = 'u8[8192]{0}', space=vmem, size = 0x2000, scoped, tag = 'input window, operand 2, single buffered']
    #allocation6 [shape = 's32[1]{0}', space=sflag, size = 0x4, scoped, tag = 'scoped memory for tpu_custom_call.1']
    #allocation7 [shape = 'u8[1024]{0}', space=vmem, size = 0x400, scoped, tag = 'output window, operand 0, single buffered']
    %12 = vsyncpa [#allocation3], 0
    %13 = vsyncpa [#allocation6], 0
    %14 = vsyncpa [#allocation4], 0
    // Predicated region
    $region2: #{tpu_custom_call.1} parent=1 // pred_check
      _
    $region3: #{tpu_custom_call.1} parent=1 // pred_check_branch
      %16 = sbr.rel (0) target = $region5
    $region4: #{tpu_custom_call.1} parent=1 // pred_region
      _
    $region5: #{tpu_custom_call.1} parent=1 // pred_fallthru
      _
    // Predicated region
    $region6: #{tpu_custom_call.1} parent=1 // pred_check
      _
    $region7: #{tpu_custom_call.1} parent=1 // pred_check_branch
      %18 = sbr.rel (0) target = $region9
    $region8: #{tpu_custom_call.1} parent=1 // pred_region
      %20 = vsyncadd [#allocation3], 0
      %s21 = sshll.u32 %s1, 4
      %s22 = int_to_ptr.hbm [resolvable:$true] %s21
      %s23 = sshll.u32 [#allocation2], 4
      %s24 = int_to_ptr.vmem [resolvable:$true] %s23
      %29 = dma.hbm_to_vmem [thread:$0]  %s22, 256, %s24, [#allocation3], 128, 128, 8
    $region9: #{tpu_custom_call.1} parent=1 // pred_fallthru
      _
    // Predicated region
    $region10: #{tpu_custom_call.1} parent=1 // pred_check
      _
    $region11: #{tpu_custom_call.1} parent=1 // pred_check_branch
      %31 = sbr.rel (0) target = $region13
    $region12: #{tpu_custom_call.1} parent=1 // pred_region
      %33 = vsyncadd [#allocation6], 0
      %s34 = sshll.u32 %s2, 4
      %s35 = int_to_ptr.hbm [resolvable:$true] %s34
      %s36 = sshll.u32 [#allocation5], 4
      %s37 = int_to_ptr.vmem [resolvable:$true] %s36
      %42 = dma.hbm_to_vmem [thread:$0]  %s35, 256, %s37, [#allocation6], 128, 128, 8
    $region13: #{tpu_custom_call.1} parent=1 // pred_fallthru
      _
    // Predicated region
    $region14: #{tpu_custom_call.1} parent=1 // pred_check
      _
    $region15: #{tpu_custom_call.1} parent=1 // pred_check_branch
      %44 = sbr.rel (0) target = $region17
    $region16: #{tpu_custom_call.1} parent=1 // pred_region
      _
    $region17: #{tpu_custom_call.1} parent=1 // pred_fallthru
      _
    // Predicated region
    $region18: #{tpu_custom_call.1} parent=1 // pred_check
      _
    $region19: #{tpu_custom_call.1} parent=1 // pred_check_branch
      %46 = sbr.rel (0) target = $region21
    $region20: #{tpu_custom_call.1} parent=1 // pred_region
      _
    $region21: #{tpu_custom_call.1} parent=1 // pred_fallthru
      _
    // Predicated region
    $region22: #{tpu_custom_call.1} parent=1 // pred_check
      _
    $region23: #{tpu_custom_call.1} parent=1 // pred_check_branch
      %48 = sbr.rel (0) target = $region25
    $region24: #{tpu_custom_call.1} parent=1 // pred_region
      _
    $region25: #{tpu_custom_call.1} parent=1 // pred_fallthru
      _
    // Predicated region
    $region26: #{tpu_custom_call.1} parent=1 // pred_check
      _
    $region27: #{tpu_custom_call.1} parent=1 // pred_check_branch
      %50 = sbr.rel (0) target = $region29
    $region28: #{tpu_custom_call.1} parent=1 // pred_region
      _
    $region29: #{tpu_custom_call.1} parent=1 // pred_fallthru
      _
    // Predicated region
    $region30: #{tpu_custom_call.1} parent=1 // pred_check
      _
    $region31: #{tpu_custom_call.1} parent=1 // pred_check_branch
      %52 = sbr.rel (0) target = $region33
    $region32: #{tpu_custom_call.1} parent=1 // pred_region
      %54 = dma.done [#allocation3], 256
    $region33: #{tpu_custom_call.1} parent=1 // pred_fallthru
      _
    // Predicated region
    $region34: #{tpu_custom_call.1} parent=1 // pred_check
      _
    $region35: #{tpu_custom_call.1} parent=1 // pred_check_branch
      %56 = sbr.rel (0) target = $region37
    $region36: #{tpu_custom_call.1} parent=1 // pred_region
      %58 = dma.done [#allocation6], 256
    $region37: #{tpu_custom_call.1} parent=1 // pred_fallthru
      _
    %v60 = vld [vmem:[%s0] sm:$0xff]
    %v61 = vld [vmem:[%s0 + $0x8] sm:$0xff]
    %v62 = vld [vmem:[#allocation2] sm:$0xff]
    %v63 = vld [vmem:[#allocation2 + $0x8] sm:$0xff]
    %v64 = vld [vmem:[#allocation5] sm:$0xff]
    %v65 = vld [vmem:[#allocation5 + $0x8] sm:$0xff]
    %68 = vrot.lane.b32.xlu0 %v62, 32
    %v69 = vpop.permute.xlu0 %68
    %70 = vrot.lane.b32.xlu0 %v63, 32
    %v71 = vpop.permute.xlu0 %70
    %76 = vrot.lane.b32.xlu0 %v64, 48
    %v77 = vpop.permute.xlu0 %76
    %78 = vrot.lane.b32.xlu0 %v65, 48
    %v79 = vpop.permute.xlu0 %78
    %vm82 = vcmask 261120
    %v83 = vsel %vm82, %v60, %v69
    %v84 = vsel %vm82, %v61, %v71
    %vm85 = vcmask 392192
    %v86 = vsel %vm85, %v83, %v77
    %v87 = vsel %vm85, %v84, %v79
    %v88 = vpack.c.bf16 %v87, %v86
    %v89 = vld [vmem:[%s3] sm:$0xf]
    %v90 = vld [vmem:[%s3 + $0x4] sm:$0xf]
    %v91 = vld [vmem:[%s3 + $0x8] sm:$0xf]
    %v92 = vld [vmem:[%s3 + $0xc] sm:$0xf]
    %v93 = vld [vmem:[%s3 + $0x10] sm:$0xf]
    %v94 = vld [vmem:[%s3 + $0x14] sm:$0xf]
    %v95 = vld [vmem:[%s3 + $0x18] sm:$0xf]
    %v96 = vld [vmem:[%s3 + $0x1c] sm:$0xf]
    %v97 = vld [vmem:[%s4] sm:$0x1]
    %v99 = vperm.slane %v97, 0
    %v109 = vunpack.c.l.b16 %v89
    %v110 = vunpack.c.l.b16 %v90
    %v111 = vunpack.c.l.b16 %v91
    %v112 = vunpack.c.l.b16 %v92
    %v113 = vunpack.c.l.b16 %v93
    %v114 = vunpack.c.l.b16 %v94
    %v115 = vunpack.c.l.b16 %v95
    %v116 = vunpack.c.l.b16 %v96
    %v117 = vpack.c.b16 %v110, %v109
    %v118 = vpack.c.b16 %v112, %v111
    %v119 = vpack.c.b16 %v114, %v113
    %v120 = vpack.c.b16 %v116, %v115
    %vm125 = vcmask 523264
    %v127 = vsel %vm125, %v88, 0
    %129 = vmatpush.bf16.msra.mxu0 0
    %130 = vmatpush.bf16.msra.mxu0 0
    %131 = vmatpush.bf16.msra.mxu0 0
    %132 = vmatpush.bf16.msra.mxu0 0
    %133 = vmatpush.bf16.msra.mxu0 %v120
    %134 = vmatpush.bf16.msra.mxu0 %v119
    %135 = vmatpush.bf16.msra.mxu0 %v118
    %136 = vmatpush.bf16.msra.mxu0 %v117
    %137 = vmatmul.bf16.gmra.mxu0 %v127
    %v138 = vpop.f32.mrf.mxu0
    %v139 = vadd.f32 %v99, %v138
    %v140 = vpop.f32.mrf.mxu0
    %v141 = vadd.f32 %v99, %v140
    %142 = vdwg.mxu0
    %v143 = vmax.f32 %v139, 0.0
    %v144 = vmax.f32 %v141, 0.0
    %vm145 = vcmask 785408
    %v146 = vsel %vm145, %v143, 0.0
    %v147 = vrot.slane %v146, 4
    %v148 = vadd.f32 %v146, %v147
    %v149 = vrot.slane %v148, 2
    %v150 = vadd.f32 %v148, %v149
    %v151 = vrot.slane %v150, 1
    %v152 = vadd.f32 %v150, %v151
    %v153 = vsel %vm145, %v144, 0.0
    %v154 = vrot.slane %v153, 4
    %v155 = vadd.f32 %v153, %v154
    %v156 = vrot.slane %v155, 2
    %v157 = vadd.f32 %v155, %v156
    %v158 = vrot.slane %v157, 1
    %v159 = vadd.f32 %v157, %v158
    %v160 = vpack.c.bf16 %v152, %v152
    %v161 = vpack.c.bf16 %v159, %v159
    %v162 = vld [vmem:[%s5] sm:$0xf]
    %v163 = vld [vmem:[%s5 + $0x4] sm:$0xf]
    %v164 = vld [vmem:[%s5 + $0x8] sm:$0xf]
    %v165 = vld [vmem:[%s5 + $0xc] sm:$0xf]
    %v166 = vld [vmem:[%s5 + $0x10] sm:$0xf]
    %v167 = vld [vmem:[%s5 + $0x14] sm:$0xf]
    %v168 = vld [vmem:[%s5 + $0x18] sm:$0xf]
    %v169 = vld [vmem:[%s5 + $0x1c] sm:$0xf]
    %v170 = vld [vmem:[%s5 + $0x20] sm:$0xf]
    %v171 = vld [vmem:[%s5 + $0x24] sm:$0xf]
    %v172 = vld [vmem:[%s5 + $0x28] sm:$0xf]
    %v173 = vld [vmem:[%s5 + $0x2c] sm:$0xf]
    %v174 = vld [vmem:[%s6] sm:$0x1]
    %v176 = vperm.slane %v174, 0
    %v180 = vunpack.c.l.b16 %v160
    %v181 = vunpack.c.l.b16 %v161
    %vm182 = vcmask 1041409
    %v183 = vsel %vm182, %v181, %v180
    %v184 = vpack.c.b16 %v183, %v183
    %v197 = vunpack.c.l.b16 %v162
    %v198 = vunpack.c.l.b16 %v163
    %v199 = vunpack.c.l.b16 %v164
    %v200 = vunpack.c.l.b16 %v165
    %v201 = vunpack.c.l.b16 %v166
    %v202 = vunpack.c.l.b16 %v167
    %v203 = vunpack.c.l.b16 %v168
    %v204 = vunpack.c.l.b16 %v169
    %v205 = vunpack.c.l.b16 %v170
    %v206 = vunpack.c.l.b16 %v171
    %v207 = vunpack.c.l.b16 %v172
    %v208 = vunpack.c.l.b16 %v173
    %v209 = vpack.c.b16 %v198, %v197
    %v210 = vpack.c.b16 %v200, %v199
    %v211 = vpack.c.b16 %v202, %v201
    %v212 = vpack.c.b16 %v204, %v203
    %v213 = vpack.c.b16 %v206, %v205
    %v214 = vpack.c.b16 %v208, %v207
    %v222 = vsel %vm145, %v184, 0
    %224 = vmatpush.bf16.msra.mxu0 0
    %225 = vmatpush.bf16.msra.mxu0 0
    %226 = vmatpush.bf16.msra.mxu0 %v214
    %227 = vmatpush.bf16.msra.mxu0 %v213
    %228 = vmatpush.bf16.msra.mxu0 %v212
    %229 = vmatpush.bf16.msra.mxu0 %v211
    %230 = vmatpush.bf16.msra.mxu0 %v210
    %231 = vmatpush.bf16.msra.mxu0 %v209
    %232 = vmatmul.bf16.gmra.mxu0 %v222
    %v233 = vpop.f32.mrf.mxu0
    %v234 = vadd.f32 %v176, %v233
    %v235 = vpop.f32.mrf.mxu0
    %236 = vdwg.mxu0
    %vm237 = vcmask 58368
    %238 = vst.msk [vmem:[#allocation7] sm:$0x3] %vm237, %v234
    // Predicated region
    $region38: #{tpu_custom_call.1} parent=1 // pred_check
      _
    $region39: #{tpu_custom_call.1} parent=1 // pred_check_branch
      %240 = sbr.rel (0) target = $region41
    $region40: #{tpu_custom_call.1} parent=1 // pred_region
      %242 = vsyncadd [#allocation4], 0
      %s244 = sshll.u32 [#allocation7], 4
      %s245 = int_to_ptr.vmem [resolvable:$true] %s244
      %s246 = sshll.u32 %s7, 4
      %s247 = int_to_ptr.hbm [resolvable:$true] %s246
      %249 = dma.vmem_to_hbm [thread:$0]  %s245, 32, %s247, [#allocation4]
    $region41: #{tpu_custom_call.1} parent=1 // pred_fallthru
      _
    // Predicated region
    $region42: #{tpu_custom_call.1} parent=1 // pred_check
      _
    $region43: #{tpu_custom_call.1} parent=1 // pred_check_branch
      %251 = sbr.rel (0) target = $region45
    $region44: #{tpu_custom_call.1} parent=1 // pred_region
      %253 = dma.done [#allocation4], 32
    $region45: #{tpu_custom_call.1} parent=1 // pred_fallthru
      _
    %254 = vsyncpa [#allocation3], 1
    %255 = vsyncpa [#allocation6], 1
    %256 = vsyncpa [#allocation4], 1

</llo_original>
